<compile_context>
chip_gen: v5e
topology: v5e:2x2
jax: 0.10.0
libtpu: 0.0.40
codegen_flags: <defaults>
</compile_context>

<pallas_src>
import jax
import jax.numpy as jnp
from jax.experimental import pallas as pl
from jax.experimental.pallas import tpu as pltpu


def _round_up(x, m):
    return ((x + m - 1) // m) * m


def _tpu_generation():
    """Best-effort TPU generation from device_kind (falls back to a conservative default)."""
    try:
        kind = jax.devices()[0].device_kind.lower()
    except Exception:
        return "unknown"
    if "v5 lite" in kind or "v5e" in kind or "v5lite" in kind:
        return "v5e"
    if "v6" in kind:
        return "v6e"
    if "v7" in kind or "7x" in kind or "tpu7" in kind:
        return "v7x"
    return "unknown"


# generation -> (num_tensorcores, scoped_vmem_default_bytes, physical_vmem_bytes)
_GEN_CONFIG = {
    "v5e": (1, 16 << 20, 128 << 20),
    "v6e": (1, 32 << 20, 128 << 20),
    "v7x": (2, 32 << 20, 64 << 20),
    "unknown": (2, 16 << 20, 64 << 20),  # conservative: also covers v4/v5p (megacore)
}


def _mlp_kernel(x_ref, w0_ref, b0_ref, w1_ref, b1_ref, w2_ref, b2_ref, out_ref):
    """Fused 3-layer MLP: relu(relu(x@W0+b0)@W1+b1)@W2+b2 (no final activation).

    x is loaded in its stored (HBM) dtype and cast to the weight dtype in-kernel on the VPU
    (hidden under the DMA), so the wrapper never makes an extra HBM pass over obs.
    MXU accumulates in f32; biases stay f32."""
    x = x_ref[...].astype(w0_ref.dtype)

    h0 = jnp.dot(x, w0_ref[...], preferred_element_type=jnp.float32) + b0_ref[...]
    h0 = jnp.maximum(h0, 0.0).astype(w1_ref.dtype)           # activation = ReLU

    h1 = jnp.dot(h0, w1_ref[...], preferred_element_type=jnp.float32) + b1_ref[...]
    h1 = jnp.maximum(h1, 0.0).astype(w2_ref.dtype)            # activation = ReLU

    logits = jnp.dot(h1, w2_ref[...], preferred_element_type=jnp.float32) + b2_ref[...]
    out_ref[...] = logits.astype(out_ref.dtype)                # final layer: no activation


def _default_block_b(B, bytes_per_row, num_tc, vmem_budget, align):
    """Pick the batch tile from the chip generation, not a hard-coded constant.

    Single-TC chips (v5e/v6e): fewest, biggest tiles -- each extra grid step costs ~0.35 us
    and buys nothing.  Dual-TC v7x: >= 2*num_tc steps so ("parallel",) shards across both
    cores while each core still double-buffers; footprint kept under the VMEM budget."""
    max_rows = max(align, (vmem_budget // bytes_per_row) // align * align)
    if num_tc == 1:
        cap = min(8192, max_rows)
        return B if B <= cap else cap
    if B <= 64:                       # tiny batch: splitting just adds overhead
        return B
    blk = _round_up(pl.cdiv(B, 2 * num_tc), align)
    return int(max(align, min(blk, 8192, max_rows)))


def discrete_actor_forward(obs, params, *, block_b=None, compute_dtype=None,
                           out_dtype=jnp.float32):
    """DiscreteActor MLP forward in a single fused Pallas kernel, tiled over the batch.

    obs:    [B, D] (any float dtype; streamed as stored, cast in-kernel)
    params: w0 [D,H0], b0 [1,H0], w1 [H0,H1], b1 [1,H1], w2 [H1,A+1], b2 [1,A+1]
            (weights are [in, out], i.e. transposed vs torch.nn.Linear storage)
    compute_dtype: e.g. jnp.bfloat16 to run the MXU in bf16 (f32 accumulation).  Not
            recommended on v5e (no native bf16 VPU; bandwidth saving here is negligible).
    out_dtype: dtype of the logits written to HBM (bf16 halves the dominant output DMA
            if the DiscreteEpsilonDistribution consumer tolerates bf16 logits).
    returns: logits [B, action_dim + 1] -- exactly what DiscreteEpsilonDistribution(logits=...)
            consumes; no padding, no post-kernel slice.
    """
    B, D = obs.shape
    out_dim = params["w2"].shape[1]

    w0, b0 = params["w0"], params["b0"]
    w1, b1 = params["w1"], params["b1"]
    w2, b2 = params["w2"], params["b2"]

    if compute_dtype is not None:
        # Weights are tiny (tens of KB) so casting them here is negligible; obs is deliberately
        # NOT cast in the wrapper (that would be an extra un-hidden HBM pass over obs).
        w0 = w0.astype(compute_dtype)
        w1 = w1.astype(compute_dtype)
        w2 = w2.astype(compute_dtype)
    b0 = b0.astype(jnp.float32)
    b1 = b1.astype(jnp.float32)
    b2 = b2.astype(jnp.float32)

    gen = _tpu_generation()
    num_tc, scoped_vmem, physical_vmem = _GEN_CONFIG[gen]

    obs_itemsize = jnp.dtype(obs.dtype).itemsize
    out_itemsize = jnp.dtype(out_dtype).itemsize
    min_itemsize = min(obs_itemsize, out_itemsize, jnp.dtype(w0.dtype).itemsize)
    align = max(8, 32 // max(min_itemsize, 1))     # 8 (f32), 16 (bf16), 32 (8-bit)

    # Double-buffered per-row footprint of the streamed obs tile + logits tile.
    bytes_per_row = 2 * (D * obs_itemsize + out_dim * out_itemsize)

    if block_b is None:
        block_b = _default_block_b(B, bytes_per_row, num_tc, scoped_vmem // 2, align)
    block_b = int(min(block_b, B))
    if block_b != B and block_b % 8 != 0:
        raise ValueError("block_b must equal B or be a multiple of 8 (sublane alignment)")

    grid = (pl.cdiv(B, block_b),)

    def full(arr):
        # Full-array block with a constant index_map: DMA'd once, VMEM-resident across steps.
        return pl.BlockSpec(arr.shape, lambda i: (0,) * arr.ndim)

    # Raise the scoped-VMEM limit only when this generation's default would be exceeded
    # (never triggers at these shapes unless block_b is cranked way up); cap under physical.
    weight_bytes = sum(int(a.size) * jnp.dtype(a.dtype).itemsize
                       for a in (w0, b0, w1, b1, w2, b2))
    vmem_est = 2 * weight_bytes + block_b * bytes_per_row
    cp_kwargs = dict(dimension_semantics=("parallel",))
    if vmem_est > (scoped_vmem * 3) // 4:
        cp_kwargs["vmem_limit_bytes"] = int(min(vmem_est + (4 << 20),
                                                physical_vmem - (4 << 20)))

    kernel = pl.pallas_call(
        _mlp_kernel,
        out_shape=jax.ShapeDtypeStruct((B, out_dim), out_dtype),
        grid_spec=pltpu.PrefetchScalarGridSpec(
            num_scalar_prefetch=0,
            grid=grid,
            in_specs=[
                pl.BlockSpec((block_b, D), lambda i: (i, 0)),
                full(w0), full(b0),
                full(w1), full(b1),
                full(w2), full(b2),
            ],
            out_specs=pl.BlockSpec((block_b, out_dim), lambda i: (i, 0)),
        ),
        compiler_params=pltpu.CompilerParams(**cp_kwargs),
    )
    return kernel(obs, w0, b0, w1, b1, w2, b2)


def init_params(key, obs_dim, layers, action_dim):
    """Deterministic init mimicking torch.nn.Linear default: U(-1/sqrt(fan_in), 1/sqrt(fan_in))."""
    dims = [obs_dim, *layers, action_dim + 1]
    params = {}
    for idx in range(len(dims) - 1):
        fan_in, fan_out = dims[idx], dims[idx + 1]
        key, kw, kb = jax.random.split(key, 3)
        bound = 1.0 / jnp.sqrt(fan_in)
        params[f"w{idx}"] = jax.random.uniform(
            kw, (fan_in, fan_out), jnp.float32, minval=-bound, maxval=bound)
        params[f"b{idx}"] = jax.random.uniform(
            kb, (1, fan_out), jnp.float32, minval=-bound, maxval=bound)
    return params


def reference_forward(obs, params):
    h = jnp.maximum(obs @ params["w0"] + params["b0"], 0.0)
    h = jnp.maximum(h @ params["w1"] + params["b1"], 0.0)
    return h @ params["w2"] + params["b2"]


if __name__ == "__main__":
    key = jax.random.PRNGKey(0)
    k_obs, k_params = jax.random.split(key)

    # Small, forward-consistent shapes: batch=8 observations of dim 16,
    # hidden layers [32, 32], action_dim=6 -> logits dim = action_dim + 1 = 7.
    obs_dim, layers, action_dim, batch = 16, [32, 32], 6, 8
    obs = jax.random.normal(k_obs, (batch, obs_dim), jnp.float32)
    params = init_params(k_params, obs_dim, layers, action_dim)

    # f32 path, single-tile grid (exact vs reference).
    logits = jax.block_until_ready(discrete_actor_forward(obs, params))
    ref = reference_forward(obs, params)
    assert logits.shape == (batch, action_dim + 1)
    assert jnp.allclose(logits, ref, atol=1e-5, rtol=1e-5), "mismatch vs reference (f32)"

    # Multi-step grid path: force block_b so every generation exercises tiling + pipelining.
    big = 1024
    obs_big = jax.random.normal(jax.random.PRNGKey(1), (big, obs_dim), jnp.float32)
    logits_big = jax.block_until_ready(discrete_actor_forward(obs_big, params, block_b=256))
    ref_big = reference_forward(obs_big, params)
    assert logits_big.shape == (big, action_dim + 1)
    assert jnp.allclose(logits_big, ref_big, atol=1e-5, rtol=1e-5), "mismatch vs reference (tiled)"

    # bf16 MXU path: obs cast in-kernel (no wrapper HBM pass), weights bf16, f32 logits out.
    logits_bf = jax.block_until_ready(
        discrete_actor_forward(obs_big, params, block_b=256, compute_dtype=jnp.bfloat16))
    assert jnp.allclose(logits_bf, ref_big, atol=5e-2, rtol=5e-2), "mismatch vs reference (bf16)"

    # TODO(synk): DiscreteEpsilonDistribution (sampling / log_prob head over these logits) is a
    # thin wrapper left outside the kernel; if its log-softmax/argmax were fused in-kernel, any
    # padded logit lanes would need to be masked to -inf (none exist in this unpadded design).
    print("KERNEL_OK")
</pallas_src>

<mosaic_0001>
module attributes {stable_mosaic.version = 11 : i64} {
  func.func @_mlp_kernel(%arg0: i32, %arg1: memref<8x16xf32, #tpu.memory_space<vmem>>, %arg2: memref<16x32xf32, #tpu.memory_space<vmem>>, %arg3: memref<1x32xf32, #tpu.memory_space<vmem>>, %arg4: memref<32x32xf32, #tpu.memory_space<vmem>>, %arg5: memref<1x32xf32, #tpu.memory_space<vmem>>, %arg6: memref<32x7xf32, #tpu.memory_space<vmem>>, %arg7: memref<1x7xf32, #tpu.memory_space<vmem>>, %arg8: memref<8x7xf32, #tpu.memory_space<vmem>>) attributes {dimension_semantics = [#tpu.dimension_semantics<parallel>], iteration_bounds = array<i64: 1>, scalar_prefetch = 0 : i64, scratch_operands = 0 : i64, tpu.core_type = #tpu.core_type<tc>, window_params = [{transform_indices = @transform_0, window_bounds = array<i64: 8, 16>}, {pipeline_mode = #tpu.pipeline_mode<synchronous>, transform_indices = @transform_1, window_bounds = array<i64: 16, 32>}, {pipeline_mode = #tpu.pipeline_mode<synchronous>, transform_indices = @transform_2, window_bounds = array<i64: 1, 32>}, {pipeline_mode = #tpu.pipeline_mode<synchronous>, transform_indices = @transform_3, window_bounds = array<i64: 32, 32>}, {pipeline_mode = #tpu.pipeline_mode<synchronous>, transform_indices = @transform_4, window_bounds = array<i64: 1, 32>}, {pipeline_mode = #tpu.pipeline_mode<synchronous>, transform_indices = @transform_5, window_bounds = array<i64: 32, 7>}, {pipeline_mode = #tpu.pipeline_mode<synchronous>, transform_indices = @transform_6, window_bounds = array<i64: 1, 7>}, {transform_indices = @transform_7, window_bounds = array<i64: 8, 7>}]} {
    %c0 = arith.constant 0 : index
    %c0_0 = arith.constant 0 : index
    %0 = vector.load %arg1[%c0, %c0_0] : memref<8x16xf32, #tpu.memory_space<vmem>>, vector<8x16xf32>
    %c0_1 = arith.constant 0 : index
    %c0_2 = arith.constant 0 : index
    %1 = vector.load %arg2[%c0_1, %c0_2] : memref<16x32xf32, #tpu.memory_space<vmem>>, vector<16x32xf32>
    %cst = arith.constant dense<0.000000e+00> : vector<8x32xf32>
    %2 = tpu.matmul %0, %1, %cst {dimension_numbers = #tpu.dot_dimension_numbers<[1], [0], [0], [1], [0, 0, 1, 1], [], []>} : vector<8x16xf32>, vector<16x32xf32>, vector<8x32xf32> -> vector<8x32xf32>
    %c0_3 = arith.constant 0 : index
    %c0_4 = arith.constant 0 : index
    %3 = vector.load %arg3[%c0_3, %c0_4] : memref<1x32xf32, #tpu.memory_space<vmem>>, vector<1x32xf32>
    %4 = vector.broadcast %3 : vector<1x32xf32> to vector<8x32xf32>
    %5 = arith.addf %2, %4 : vector<8x32xf32>
    %cst_5 = arith.constant 0.000000e+00 : f32
    %6 = vector.broadcast %cst_5 : f32 to vector<8x32xf32>
    %7 = arith.maximumf %5, %6 : vector<8x32xf32>
    %c0_6 = arith.constant 0 : index
    %c0_7 = arith.constant 0 : index
    %8 = vector.load %arg4[%c0_6, %c0_7] : memref<32x32xf32, #tpu.memory_space<vmem>>, vector<32x32xf32>
    %cst_8 = arith.constant dense<0.000000e+00> : vector<8x32xf32>
    %9 = tpu.matmul %7, %8, %cst_8 {dimension_numbers = #tpu.dot_dimension_numbers<[1], [0], [0], [1], [0, 0, 1, 1], [], []>} : vector<8x32xf32>, vector<32x32xf32>, vector<8x32xf32> -> vector<8x32xf32>
    %c0_9 = arith.constant 0 : index
    %c0_10 = arith.constant 0 : index
    %10 = vector.load %arg5[%c0_9, %c0_10] : memref<1x32xf32, #tpu.memory_space<vmem>>, vector<1x32xf32>
    %11 = vector.broadcast %10 : vector<1x32xf32> to vector<8x32xf32>
    %12 = arith.addf %9, %11 : vector<8x32xf32>
    %cst_11 = arith.constant 0.000000e+00 : f32
    %13 = vector.broadcast %cst_11 : f32 to vector<8x32xf32>
    %14 = arith.maximumf %12, %13 : vector<8x32xf32>
    %c0_12 = arith.constant 0 : index
    %c0_13 = arith.constant 0 : index
    %15 = vector.load %arg6[%c0_12, %c0_13] : memref<32x7xf32, #tpu.memory_space<vmem>>, vector<32x7xf32>
    %cst_14 = arith.constant dense<0.000000e+00> : vector<8x7xf32>
    %16 = tpu.matmul %14, %15, %cst_14 {dimension_numbers = #tpu.dot_dimension_numbers<[1], [0], [0], [1], [0, 0, 1, 1], [], []>} : vector<8x32xf32>, vector<32x7xf32>, vector<8x7xf32> -> vector<8x7xf32>
    %c0_15 = arith.constant 0 : index
    %c0_16 = arith.constant 0 : index
    %17 = vector.load %arg7[%c0_15, %c0_16] : memref<1x7xf32, #tpu.memory_space<vmem>>, vector<1x7xf32>
    %18 = vector.broadcast %17 : vector<1x7xf32> to vector<8x7xf32>
    %19 = arith.addf %16, %18 : vector<8x7xf32>
    %c0_17 = arith.constant 0 : index
    %c0_18 = arith.constant 0 : index
    %20 = vector.load %arg8[%c0_17, %c0_18] : memref<8x7xf32, #tpu.memory_space<vmem>>, vector<8x7xf32>
    tpu.vector_store %arg8[%c0_17, %c0_18], %19 {strides = array<i32>} : memref<8x7xf32, #tpu.memory_space<vmem>>, vector<8x7xf32>,
    return
  }
  func.func @transform_0(%arg0: i32) -> (i32, i32) {
    %c0_i32 = arith.constant 0 : i32
    %c0_i32_0 = arith.constant 0 : i32
    return %arg0, %c0_i32 : i32, i32
  }
  func.func @transform_1(%arg0: i32) -> (i32, i32) {
    %c0_i32 = arith.constant 0 : i32
    %c0_i32_0 = arith.constant 0 : i32
    %c0_i32_1 = arith.constant 0 : i32
    return %c0_i32, %c0_i32_0 : i32, i32
  }
  func.func @transform_2(%arg0: i32) -> (i32, i32) {
    %c0_i32 = arith.constant 0 : i32
    %c0_i32_0 = arith.constant 0 : i32
    %c0_i32_1 = arith.constant 0 : i32
    return %c0_i32, %c0_i32_0 : i32, i32
  }
  func.func @transform_3(%arg0: i32) -> (i32, i32) {
    %c0_i32 = arith.constant 0 : i32
    %c0_i32_0 = arith.constant 0 : i32
    %c0_i32_1 = arith.constant 0 : i32
    return %c0_i32, %c0_i32_0 : i32, i32
  }
  func.func @transform_4(%arg0: i32) -> (i32, i32) {
    %c0_i32 = arith.constant 0 : i32
    %c0_i32_0 = arith.constant 0 : i32
    %c0_i32_1 = arith.constant 0 : i32
    return %c0_i32, %c0_i32_0 : i32, i32
  }
  func.func @transform_5(%arg0: i32) -> (i32, i32) {
    %c0_i32 = arith.constant 0 : i32
    %c0_i32_0 = arith.constant 0 : i32
    %c0_i32_1 = arith.constant 0 : i32
    return %c0_i32, %c0_i32_0 : i32, i32
  }
  func.func @transform_6(%arg0: i32) -> (i32, i32) {
    %c0_i32 = arith.constant 0 : i32
    %c0_i32_0 = arith.constant 0 : i32
    %c0_i32_1 = arith.constant 0 : i32
    return %c0_i32, %c0_i32_0 : i32, i32
  }
  func.func @transform_7(%arg0: i32) -> (i32, i32) {
    %c0_i32 = arith.constant 0 : i32
    %c0_i32_0 = arith.constant 0 : i32
    return %arg0, %c0_i32 : i32, i32
  }
}

</mosaic_0001>

<llo_original>
// kernel: tpu_custom_call.1
$region0: #{tpu_custom_call.1}
  #allocation0 [shape = 'u32[]', space=smem, size = 0x4, offset = 0x4, fixed_abs, tag = 'smem constant byte address 0x4 - core index']
  #allocation1 [shape = 'u32[72,128]{1,0:T(1,128)}', space=vmem, size = 0x9000, scoped, tag = 'internal scratch']
  %s0 = inlined_call_operand.vmem [shape: f32[8,16], index: 0, kind: input, shape index: {}]
  %s1 = inlined_call_operand.hbm [shape: f32[16,32], index: 1, kind: input, shape index: {}]
  %s2 = inlined_call_operand.vmem [shape: f32[1,32], index: 2, kind: input, shape index: {}]
  %s3 = inlined_call_operand.vmem [shape: f32[32,32], index: 3, kind: input, shape index: {}]
  %s4 = inlined_call_operand.vmem [shape: f32[1,32], index: 4, kind: input, shape index: {}]
  %s5 = inlined_call_operand.vmem [shape: f32[32,7], index: 5, kind: input, shape index: {}]
  %s6 = inlined_call_operand.vmem [shape: f32[1,7], index: 6, kind: input, shape index: {}]
  %s7 = inlined_call_operand.hbm [shape: f32[8,7], index: 7, kind: output, shape index: {}]
  %s8 = sld [smem:[#allocation0]]
  $region42: #{tpu_custom_call.1} parent=0
    _
  %s10 = ssub.s32 1, %s8
  %s11 = scalar_select 0, %s10, %s8
  $region1: #{tpu_custom_call.1} parent=0
    #allocation2 [shape = 'u8[8192]{0}', space=vmem, size = 0x2000, scoped, tag = 'input window, operand 1, single buffered']
    #allocation3 [shape = 's32[1]{0}', space=sflag, size = 0x4, scoped, tag = 'scoped memory for tpu_custom_call.1']
    #allocation4 [shape = 's32[1]{0}', space=sflag, size = 0x4, scoped, tag = 'scoped memory for tpu_custom_call.1']
    #allocation5 [shape = 'u8[4096]{0}', space=vmem, size = 0x1000, scoped, tag = 'output window, operand 0, single buffered']
    %12 = vsyncpa [#allocation3], 0
    %13 = vsyncpa [#allocation4], 0
    // Predicated region
    $region2: #{tpu_custom_call.1} parent=1 // pred_check
      _
    $region3: #{tpu_custom_call.1} parent=1 // pred_check_branch
      %15 = sbr.rel (0) target = $region5
    $region4: #{tpu_custom_call.1} parent=1 // pred_region
      _
    $region5: #{tpu_custom_call.1} parent=1 // pred_fallthru
      _
    // Predicated region
    $region6: #{tpu_custom_call.1} parent=1 // pred_check
      _
    $region7: #{tpu_custom_call.1} parent=1 // pred_check_branch
      %17 = sbr.rel (0) target = $region9
    $region8: #{tpu_custom_call.1} parent=1 // pred_region
      %19 = vsyncadd [#allocation3], 0
      %s20 = sshll.u32 %s1, 4
      %s21 = int_to_ptr.hbm [resolvable:$true] %s20
      %s22 = sshll.u32 [#allocation2], 4
      %s23 = int_to_ptr.vmem [resolvable:$true] %s22
      %28 = dma.hbm_to_vmem [thread:$0]  %s21, 256, %s23, [#allocation3], 128, 128, 8
    $region9: #{tpu_custom_call.1} parent=1 // pred_fallthru
      _
    // Predicated region
    $region10: #{tpu_custom_call.1} parent=1 // pred_check
      _
    $region11: #{tpu_custom_call.1} parent=1 // pred_check_branch
      %30 = sbr.rel (0) target = $region13
    $region12: #{tpu_custom_call.1} parent=1 // pred_region
      _
    $region13: #{tpu_custom_call.1} parent=1 // pred_fallthru
      _
    // Predicated region
    $region14: #{tpu_custom_call.1} parent=1 // pred_check
      _
    $region15: #{tpu_custom_call.1} parent=1 // pred_check_branch
      %32 = sbr.rel (0) target = $region17
    $region16: #{tpu_custom_call.1} parent=1 // pred_region
      _
    $region17: #{tpu_custom_call.1} parent=1 // pred_fallthru
      _
    // Predicated region
    $region18: #{tpu_custom_call.1} parent=1 // pred_check
      _
    $region19: #{tpu_custom_call.1} parent=1 // pred_check_branch
      %34 = sbr.rel (0) target = $region21
    $region20: #{tpu_custom_call.1} parent=1 // pred_region
      _
    $region21: #{tpu_custom_call.1} parent=1 // pred_fallthru
      _
    // Predicated region
    $region22: #{tpu_custom_call.1} parent=1 // pred_check
      _
    $region23: #{tpu_custom_call.1} parent=1 // pred_check_branch
      %36 = sbr.rel (0) target = $region25
    $region24: #{tpu_custom_call.1} parent=1 // pred_region
      _
    $region25: #{tpu_custom_call.1} parent=1 // pred_fallthru
      _
    // Predicated region
    $region26: #{tpu_custom_call.1} parent=1 // pred_check
      _
    $region27: #{tpu_custom_call.1} parent=1 // pred_check_branch
      %38 = sbr.rel (0) target = $region29
    $region28: #{tpu_custom_call.1} parent=1 // pred_region
      _
    $region29: #{tpu_custom_call.1} parent=1 // pred_fallthru
      _
    // Predicated region
    $region30: #{tpu_custom_call.1} parent=1 // pred_check
      _
    $region31: #{tpu_custom_call.1} parent=1 // pred_check_branch
      %40 = sbr.rel (0) target = $region33
    $region32: #{tpu_custom_call.1} parent=1 // pred_region
      %42 = dma.done [#allocation3], 256
    $region33: #{tpu_custom_call.1} parent=1 // pred_fallthru
      _
    %v43 = vld [vmem:[%s0] sm:$0xff]
    %v44 = vld [vmem:[#allocation2] sm:$0xff]
    %v45 = vld [vmem:[#allocation2 + $0x8] sm:$0xff]
    %v46 = vld [vmem:[%s2] sm:$0x1]
    %v48 = vperm.slane %v46, 0
    %vm50 = vcmask 130048
    %v52 = vsel %vm50, %v43, 0
    %54 = vmatpush.msra.mxu0 0.0
    %55 = vmatpush.msra.mxu0 0.0
    %56 = vmatpush.msra.mxu0 0.0
    %57 = vmatpush.msra.mxu0 0.0
    %58 = vmatpush.msra.mxu0 0.0
    %59 = vmatpush.msra.mxu0 0.0
    %60 = vmatpush.msra.mxu0 0.0
    %61 = vmatpush.msra.mxu0 0.0
    %62 = vmatpush.msra.mxu0 0.0
    %63 = vmatpush.msra.mxu0 0.0
    %64 = vmatpush.msra.mxu0 0.0
    %65 = vmatpush.msra.mxu0 0.0
    %66 = vmatpush.msra.mxu0 0.0
    %67 = vmatpush.msra.mxu0 0.0
    %68 = vmatpush.msra.mxu0 %v45
    %69 = vmatpush.msra.mxu0 %v44
    %70 = vmatmul.f32.gmra.mxu0 %v52
    %v71 = vpop.f32.mrf.mxu0
    %v72 = vadd.f32 %v48, %v71
    %73 = vdwg.mxu0
    %v74 = vmax.f32 %v72, 0.0
    %v75 = vld [vmem:[%s3] sm:$0xff]
    %v76 = vld [vmem:[%s3 + $0x8] sm:$0xff]
    %v77 = vld [vmem:[%s3 + $0x10] sm:$0xff]
    %v78 = vld [vmem:[%s3 + $0x18] sm:$0xff]
    %v79 = vld [vmem:[%s4] sm:$0x1]
    %v81 = vperm.slane %v79, 0
    %vm83 = vcmask 261120
    %v85 = vsel %vm83, %v74, 0
    %87 = vmatpush.msra.mxu0 0.0
    %88 = vmatpush.msra.mxu0 0.0
    %89 = vmatpush.msra.mxu0 0.0
    %90 = vmatpush.msra.mxu0 0.0
    %91 = vmatpush.msra.mxu0 0.0
    %92 = vmatpush.msra.mxu0 0.0
    %93 = vmatpush.msra.mxu0 0.0
    %94 = vmatpush.msra.mxu0 0.0
    %95 = vmatpush.msra.mxu0 0.0
    %96 = vmatpush.msra.mxu0 0.0
    %97 = vmatpush.msra.mxu0 0.0
    %98 = vmatpush.msra.mxu0 0.0
    %99 = vmatpush.msra.mxu0 %v78
    %100 = vmatpush.msra.mxu0 %v77
    %101 = vmatpush.msra.mxu0 %v76
    %102 = vmatpush.msra.mxu0 %v75
    %103 = vmatmul.f32.gmra.mxu0 %v85
    %v104 = vpop.f32.mrf.mxu0
    %v105 = vadd.f32 %v81, %v104
    %106 = vdwg.mxu0
    %v107 = vmax.f32 %v105, 0.0
    %v108 = vld [vmem:[%s5] sm:$0xff]
    %v109 = vld [vmem:[%s5 + $0x8] sm:$0xff]
    %v110 = vld [vmem:[%s5 + $0x10] sm:$0xff]
    %v111 = vld [vmem:[%s5 + $0x18] sm:$0xff]
    %v112 = vld [vmem:[%s6] sm:$0x1]
    %v114 = vperm.slane %v112, 0
    %v117 = vsel %vm83, %v107, 0
    %119 = vmatpush.msra.mxu0 0.0
    %120 = vmatpush.msra.mxu0 0.0
    %121 = vmatpush.msra.mxu0 0.0
    %122 = vmatpush.msra.mxu0 0.0
    %123 = vmatpush.msra.mxu0 0.0
    %124 = vmatpush.msra.mxu0 0.0
    %125 = vmatpush.msra.mxu0 0.0
    %126 = vmatpush.msra.mxu0 0.0
    %127 = vmatpush.msra.mxu0 0.0
    %128 = vmatpush.msra.mxu0 0.0
    %129 = vmatpush.msra.mxu0 0.0
    %130 = vmatpush.msra.mxu0 0.0
    %131 = vmatpush.msra.mxu0 %v111
    %132 = vmatpush.msra.mxu0 %v110
    %133 = vmatpush.msra.mxu0 %v109
    %134 = vmatpush.msra.mxu0 %v108
    %135 = vmatmul.f32.gmra.mxu0 %v117
    %v136 = vpop.f32.mrf.mxu0
    %v137 = vadd.f32 %v114, %v136
    %138 = vdwg.mxu0
    %vm139 = vcmask 56320
    %140 = vst.msk [vmem:[#allocation5] sm:$0xff] %vm139, %v137
    // Predicated region
    $region34: #{tpu_custom_call.1} parent=1 // pred_check
      _
    $region35: #{tpu_custom_call.1} parent=1 // pred_check_branch
      %142 = sbr.rel (0) target = $region37
    $region36: #{tpu_custom_call.1} parent=1 // pred_region
      %144 = vsyncadd [#allocation4], 0
      %s146 = sshll.u32 [#allocation5], 4
      %s147 = int_to_ptr.vmem [resolvable:$true] %s146
      %s148 = sshll.u32 %s7, 4
      %s149 = int_to_ptr.hbm [resolvable:$true] %s148
      %151 = dma.vmem_to_hbm [thread:$0]  %s147, 128, %s149, [#allocation4]
    $region37: #{tpu_custom_call.1} parent=1 // pred_fallthru
      _
    // Predicated region
    $region38: #{tpu_custom_call.1} parent=1 // pred_check
      _
    $region39: #{tpu_custom_call.1} parent=1 // pred_check_branch
      %153 = sbr.rel (0) target = $region41
    $region40: #{tpu_custom_call.1} parent=1 // pred_region
      %155 = dma.done [#allocation4], 128
    $region41: #{tpu_custom_call.1} parent=1 // pred_fallthru
      _
    %156 = vsyncpa [#allocation3], 1
    %157 = vsyncpa [#allocation4], 1

</llo_original>
